<compile_context>
chip_gen: v7x
topology: tpu7x:2x2x1
jax: 0.10.0
libtpu: 0.0.40
codegen_flags: <defaults>
</compile_context>

<pallas_src>
import jax
import jax.numpy as jnp
from jax.experimental import pallas as pl
from jax.experimental.pallas import tpu as pltpu


def _scale_bias_tanh_kernel(w_ref, b_ref, x_ref, o_ref):
    # w_ref, b_ref: (1, 1) scalars in SMEM (the 1x1x1x1 conv weight and bias).
    # x_ref, o_ref: (block_rows, lanes) VMEM tiles of flattened pixels.
    w = w_ref[0, 0]
    b = b_ref[0, 0]
    # VPU multiply-add + EUP tanh; memory-bound, so no MXU involvement.
    o_ref[...] = jnp.tanh(x_ref[...] * w + b).astype(o_ref.dtype)


def _sublane_multiple(dtype):
    # Sub-32-bit dtypes pack along sublanes: 8 rows for 4-byte, 16 for 2-byte,
    # 32 for 1-byte element types.
    return {4: 8, 2: 16, 1: 32}.get(jnp.dtype(dtype).itemsize, 8)


def conv1x1_tanh(x_nchw, weight, bias, *,
                 target_tile_bytes=2 * 1024 * 1024,
                 small_input_bytes=128 * 1024):
    """Fused Conv2d(1, 1, kernel_size=1, stride=1, padding=0) + Tanh.

    x_nchw: (N, 1, H, W)
    weight: (1, 1, 1, 1)   (PyTorch Conv2d layout)
    bias:   (1,)
    returns (N, 1, H, W)
    """
    N, Cin, H, W = x_nchw.shape
    Cout, Cin_w, kh, kw = weight.shape
    assert (Cin, Cout, Cin_w, kh, kw) == (1, 1, 1, 1, 1), (
        "ModelTanh fixes Conv2d(1, 1, kernel_size=1); the fused elementwise "
        "path requires Cin == Cout == 1.")
    # TODO(synk): a general Cin/Cout > 1 path would use an MXU matmul over the
    # channel dims; not needed for this module.

    out_dtype = x_nchw.dtype
    itemsize = jnp.dtype(out_dtype).itemsize
    total = N * H * W

    # --- small-input fast path: launch + pipeline fixed cost dominates; let
    # XLA fuse the scalar scale+bias+tanh instead.
    if total * itemsize <= small_input_bytes:
        return jnp.tanh(x_nchw * weight.reshape(()) + bias.reshape(())
                        ).astype(out_dtype)

    # --- lane-dense 2-D view; avoid any pad/slice whenever total % 128 == 0.
    lanes = 128
    for cand in (1024, 512, 256, 128):
        if total % cand == 0:
            lanes = cand
            break
    pad = (-total) % lanes              # nonzero only when total % 128 != 0
    rows = (total + pad) // lanes

    x_flat = x_nchw.reshape(-1)
    if pad:
        x_flat = jnp.pad(x_flat, (0, pad))   # < 128 elements of padding
    x2d = x_flat.reshape(rows, lanes)

    # --- row tiling: ~target_tile_bytes per block, dtype-aware sublane
    # multiple, partial last block handled by Pallas (no row padding).
    sub = _sublane_multiple(out_dtype)
    tgt_rows = max(sub, (target_tile_bytes // (lanes * itemsize)) // sub * sub)
    if tgt_rows >= rows:
        block_rows = rows               # single full-extent block (legal)
        num_steps = 1
    else:
        block_rows = tgt_rows
        num_steps = pl.cdiv(rows, block_rows)
        # Prefer an even step count so the single "parallel" axis splits
        # evenly across the two TensorCores on v7x (no-op on v5e/v6e).
        if num_steps % 2 == 1 and num_steps > 1:
            alt = ((pl.cdiv(rows, num_steps + 1) + sub - 1) // sub) * sub
            if alt >= sub and pl.cdiv(rows, alt) % 2 == 0:
                block_rows = alt
                num_steps = pl.cdiv(rows, alt)

    w_scalar = weight.reshape(1, 1).astype(jnp.float32)
    b_scalar = bias.reshape(1, 1).astype(jnp.float32)

    out2d = pl.pallas_call(
        _scale_bias_tanh_kernel,
        out_shape=jax.ShapeDtypeStruct((rows, lanes), out_dtype),
        grid=(num_steps,),
        in_specs=[
            pl.BlockSpec(memory_space=pltpu.MemorySpace.SMEM),    # weight scalar
            pl.BlockSpec(memory_space=pltpu.MemorySpace.SMEM),    # bias scalar
            pl.BlockSpec((block_rows, lanes), lambda i: (i, 0)),  # input tile
        ],
        out_specs=pl.BlockSpec((block_rows, lanes), lambda i: (i, 0)),
        compiler_params=pltpu.CompilerParams(
            # Memory-bound elementwise loop: shard the row axis across both
            # TensorCores on v7x (no-op on single-TC v5e/v6e).  ~2 MiB tiles
            # double-buffered (in + out ≈ 8 MiB) fit every chip's default
            # scoped-VMEM limit, so no vmem_limit_bytes override.
            dimension_semantics=("parallel",),
        ),
    )(w_scalar, b_scalar, x2d)

    out_flat = out2d.reshape(-1)
    if pad:
        out_flat = out_flat[:total]     # only when total % 128 != 0
    return out_flat.reshape(N, Cout, H, W)


if __name__ == "__main__":
    key = jax.random.PRNGKey(0)
    kw, kb, k1, k2, k3, k4 = jax.random.split(key, 6)

    # Module implies Conv2d(1, 1, kernel_size=1): Cin = Cout = 1.
    weight = jax.random.normal(kw, (1, 1, 1, 1), dtype=jnp.float32) * 0.5
    bias = jax.random.normal(kb, (1,), dtype=jnp.float32) * 0.1

    def ref(x):
        return jnp.tanh(x * weight.reshape(()) + bias.reshape(()))

    # 1) Tiny input (fast path, like the module's 1x1x3x3 example).
    x_tiny = jax.random.normal(k1, (2, 1, 8, 8), dtype=jnp.float32)
    out_tiny = jax.block_until_ready(conv1x1_tanh(x_tiny, weight, bias))
    assert out_tiny.shape == x_tiny.shape
    assert jnp.allclose(out_tiny, ref(x_tiny), atol=1e-5, rtol=1e-5)

    # 2) Pallas path, no padding, single block (total % 1024 == 0).
    x_med = jax.random.normal(k2, (2, 1, 128, 256), dtype=jnp.float32)
    out_med = jax.block_until_ready(conv1x1_tanh(x_med, weight, bias))
    assert out_med.shape == x_med.shape
    assert jnp.allclose(out_med, ref(x_med), atol=1e-5, rtol=1e-5)

    # 3) Pallas path, multi-step grid with a partial last block (no padding).
    x_part = jax.random.normal(k3, (2, 1, 100, 128), dtype=jnp.float32)
    out_part = jax.block_until_ready(
        conv1x1_tanh(x_part, weight, bias,
                     target_tile_bytes=32 * 1024, small_input_bytes=0))
    assert out_part.shape == x_part.shape
    assert jnp.allclose(out_part, ref(x_part), atol=1e-5, rtol=1e-5)

    # 4) Pallas path where total % 128 != 0 (minimal pad + tail slice).
    x_odd = jax.random.normal(k4, (1, 1, 3, 3), dtype=jnp.float32)
    out_odd = jax.block_until_ready(
        conv1x1_tanh(x_odd, weight, bias, small_input_bytes=0))
    assert out_odd.shape == x_odd.shape
    assert jnp.allclose(out_odd, ref(x_odd), atol=1e-5, rtol=1e-5)

    print("KERNEL_OK")
</pallas_src>

<mosaic_0001>
module attributes {stable_mosaic.version = 11 : i64} {
  func.func @_scale_bias_tanh_kernel(%arg0: i32, %arg1: memref<1x1xf32, #tpu.memory_space<smem>>, %arg2: memref<1x1xf32, #tpu.memory_space<smem>>, %arg3: memref<64x1024xf32, #tpu.memory_space<vmem>>, %arg4: memref<64x1024xf32, #tpu.memory_space<vmem>>) attributes {dimension_semantics = [#tpu.dimension_semantics<parallel>], iteration_bounds = array<i64: 1>, scalar_prefetch = 0 : i64, scratch_operands = 0 : i64, tpu.core_type = #tpu.core_type<tc>, window_params = [{transform_indices = @transform_0, window_bounds = array<i64: 1, 1>}, {transform_indices = @transform_1, window_bounds = array<i64: 1, 1>}, {transform_indices = @transform_2, window_bounds = array<i64: 64, 1024>}, {transform_indices = @transform_3, window_bounds = array<i64: 64, 1024>}]} {
    %c0 = arith.constant 0 : index
    %c0_0 = arith.constant 0 : index
    %0 = memref.load %arg1[%c0, %c0_0] : memref<1x1xf32, #tpu.memory_space<smem>>
    %c0_1 = arith.constant 0 : index
    %c0_2 = arith.constant 0 : index
    %1 = memref.load %arg2[%c0_1, %c0_2] : memref<1x1xf32, #tpu.memory_space<smem>>
    %c0_3 = arith.constant 0 : index
    %c0_4 = arith.constant 0 : index
    %2 = vector.load %arg3[%c0_3, %c0_4] : memref<64x1024xf32, #tpu.memory_space<vmem>>, vector<64x1024xf32>
    %3 = vector.broadcast %0 : f32 to vector<64x1024xf32>
    %4 = arith.mulf %2, %3 : vector<64x1024xf32>
    %5 = vector.broadcast %1 : f32 to vector<64x1024xf32>
    %6 = arith.addf %4, %5 : vector<64x1024xf32>
    %7 = math.tanh %6 : vector<64x1024xf32>
    %c0_5 = arith.constant 0 : index
    %c0_6 = arith.constant 0 : index
    %8 = vector.load %arg4[%c0_5, %c0_6] : memref<64x1024xf32, #tpu.memory_space<vmem>>, vector<64x1024xf32>
    tpu.vector_store %arg4[%c0_5, %c0_6], %7 {strides = array<i32>} : memref<64x1024xf32, #tpu.memory_space<vmem>>, vector<64x1024xf32>,
    return
  }
  func.func @transform_0(%arg0: i32) -> (i32, i32) {
    %c0_i32 = arith.constant 0 : i32
    %c0_i32_0 = arith.constant 0 : i32
    %c0_i32_1 = arith.constant 0 : i32
    return %c0_i32, %c0_i32_0 : i32, i32
  }
  func.func @transform_1(%arg0: i32) -> (i32, i32) {
    %c0_i32 = arith.constant 0 : i32
    %c0_i32_0 = arith.constant 0 : i32
    %c0_i32_1 = arith.constant 0 : i32
    return %c0_i32, %c0_i32_0 : i32, i32
  }
  func.func @transform_2(%arg0: i32) -> (i32, i32) {
    %c0_i32 = arith.constant 0 : i32
    %c0_i32_0 = arith.constant 0 : i32
    return %arg0, %c0_i32 : i32, i32
  }
  func.func @transform_3(%arg0: i32) -> (i32, i32) {
    %c0_i32 = arith.constant 0 : i32
    %c0_i32_0 = arith.constant 0 : i32
    return %arg0, %c0_i32 : i32, i32
  }
}

</mosaic_0001>

<llo_original>
// kernel: tpu_custom_call.1
$region0: #{tpu_custom_call.1}
  #allocation0 [shape = 'u32[]', space=smem, size = 0x4, offset = 0x4, fixed_abs, tag = 'smem constant byte address 0x4 - core index']
  #allocation1 [shape = 'u32[144,128]{1,0:T(1,128)}', space=vmem, size = 0x12000, scoped, tag = 'internal scratch']
  #allocation2 [shape = 'f32[1,1]{1,0:T(1,128)S(6)}', space=smem, size = 0x200, scoped, tag = 'scoped memory for tpu_custom_call.1']
  #allocation3 [shape = 'f32[1,1]{1,0:T(1,128)S(6)}', space=smem, size = 0x200, scoped, tag = 'scoped memory for tpu_custom_call.1']
  %s0 = inlined_call_operand.<no memory space> [shape: f32[1,1], index: 0, kind: input, shape index: {}]
  %s1 = inlined_call_operand.<no memory space> [shape: f32[1,1], index: 1, kind: input, shape index: {}]
  %s2 = inlined_call_operand.hbm [shape: f32[64,1024], index: 2, kind: input, shape index: {}]
  %s3 = inlined_call_operand.hbm [shape: f32[64,1024], index: 3, kind: output, shape index: {}]
  %s4 = sld [smem:[#allocation0]]
  $region26: #{tpu_custom_call.1} parent=0
    _
  %s6 = ssub.s32 1, %s4
  %s7 = scalar_select 0, %s6, %s4
  %8 = sst [smem:[#allocation2]] %s0
  %9 = sst [smem:[#allocation3]] %s1
  $region1: #{tpu_custom_call.1} parent=0
    #allocation4 [shape = 'u8[262144]{0}', space=vmem, size = 0x40000, scoped, tag = 'input window, operand 2, single buffered']
    #allocation5 [shape = 's32[1]{0}', space=sflag, size = 0x4, scoped, tag = 'scoped memory for tpu_custom_call.1']
    #allocation6 [shape = 's32[1]{0}', space=sflag, size = 0x4, scoped, tag = 'scoped memory for tpu_custom_call.1']
    #allocation7 [shape = 'u8[262144]{0}', space=vmem, size = 0x40000, scoped, tag = 'output window, operand 0, single buffered']
    %10 = vsyncpa [#allocation5], 0
    %11 = vsyncpa [#allocation6], 0
    // Predicated region
    $region2: #{tpu_custom_call.1} parent=1 // pred_check
      _
    $region3: #{tpu_custom_call.1} parent=1 // pred_check_branch
      %13 = sbr.rel (0) target = $region5
    $region4: #{tpu_custom_call.1} parent=1 // pred_region
      _
    $region5: #{tpu_custom_call.1} parent=1 // pred_fallthru
      _
    // Predicated region
    $region6: #{tpu_custom_call.1} parent=1 // pred_check
      _
    $region7: #{tpu_custom_call.1} parent=1 // pred_check_branch
      %15 = sbr.rel (0) target = $region9
    $region8: #{tpu_custom_call.1} parent=1 // pred_region
      _
    $region9: #{tpu_custom_call.1} parent=1 // pred_fallthru
      _
    // Predicated region
    $region10: #{tpu_custom_call.1} parent=1 // pred_check
      _
    $region11: #{tpu_custom_call.1} parent=1 // pred_check_branch
      %17 = sbr.rel (0) target = $region13
    $region12: #{tpu_custom_call.1} parent=1 // pred_region
      %s19 = ssub.s32 8192, 8192
      %20 = vsyncadd [#allocation5], %s19
      %s21 = sshll.u32 [#allocation4], 4
      %s22 = int_to_ptr.vmem [resolvable:$true] %s21
      %27 = dma.hbm_to_vmem [thread:$0]  %s2, 8192, %s22, [#allocation5], 1024, 1024, 64
    $region13: #{tpu_custom_call.1} parent=1 // pred_fallthru
      _
    // Predicated region
    $region14: #{tpu_custom_call.1} parent=1 // pred_check
      _
    $region15: #{tpu_custom_call.1} parent=1 // pred_check_branch
      %29 = sbr.rel (0) target = $region17
    $region16: #{tpu_custom_call.1} parent=1 // pred_region
      %30 = dma.done [#allocation5], 8192
    $region17: #{tpu_custom_call.1} parent=1 // pred_fallthru
      _
    %s31 = sld [smem:[#allocation2]]
    %s32 = sld [smem:[#allocation3]]
    %v33 = vld [vmem:[#allocation4] sm:$0xff]
    %v34 = vld [vmem:[#allocation4 + $0x8] sm:$0xff]
    %v35 = vld [vmem:[#allocation4 + $0x10] sm:$0xff]
    %v36 = vld [vmem:[#allocation4 + $0x18] sm:$0xff]
    %v37 = vld [vmem:[#allocation4 + $0x20] sm:$0xff]
    %v38 = vld [vmem:[#allocation4 + $0x28] sm:$0xff]
    %v39 = vld [vmem:[#allocation4 + $0x30] sm:$0xff]
    %v40 = vld [vmem:[#allocation4 + $0x38] sm:$0xff]
    %v41 = vld [vmem:[#allocation4 + $0x40] sm:$0xff]
    %v42 = vld [vmem:[#allocation4 + $0x48] sm:$0xff]
    %v43 = vld [vmem:[#allocation4 + $0x50] sm:$0xff]
    %v44 = vld [vmem:[#allocation4 + $0x58] sm:$0xff]
    %v45 = vld [vmem:[#allocation4 + $0x60] sm:$0xff]
    %v46 = vld [vmem:[#allocation4 + $0x68] sm:$0xff]
    %v47 = vld [vmem:[#allocation4 + $0x70] sm:$0xff]
    %v48 = vld [vmem:[#allocation4 + $0x78] sm:$0xff]
    %v49 = vld [vmem:[#allocation4 + $0x80] sm:$0xff]
    %v50 = vld [vmem:[#allocation4 + $0x88] sm:$0xff]
    %v51 = vld [vmem:[#allocation4 + $0x90] sm:$0xff]
    %v52 = vld [vmem:[#allocation4 + $0x98] sm:$0xff]
    %v53 = vld [vmem:[#allocation4 + $0xa0] sm:$0xff]
    %v54 = vld [vmem:[#allocation4 + $0xa8] sm:$0xff]
    %v55 = vld [vmem:[#allocation4 + $0xb0] sm:$0xff]
    %v56 = vld [vmem:[#allocation4 + $0xb8] sm:$0xff]
    %v57 = vld [vmem:[#allocation4 + $0xc0] sm:$0xff]
    %v58 = vld [vmem:[#allocation4 + $0xc8] sm:$0xff]
    %v59 = vld [vmem:[#allocation4 + $0xd0] sm:$0xff]
    %v60 = vld [vmem:[#allocation4 + $0xd8] sm:$0xff]
    %v61 = vld [vmem:[#allocation4 + $0xe0] sm:$0xff]
    %v62 = vld [vmem:[#allocation4 + $0xe8] sm:$0xff]
    %v63 = vld [vmem:[#allocation4 + $0xf0] sm:$0xff]
    %v64 = vld [vmem:[#allocation4 + $0xf8] sm:$0xff]
    %v65 = vld [vmem:[#allocation4 + $0x100] sm:$0xff]
    %v66 = vld [vmem:[#allocation4 + $0x108] sm:$0xff]
    %v67 = vld [vmem:[#allocation4 + $0x110] sm:$0xff]
    %v68 = vld [vmem:[#allocation4 + $0x118] sm:$0xff]
    %v69 = vld [vmem:[#allocation4 + $0x120] sm:$0xff]
    %v70 = vld [vmem:[#allocation4 + $0x128] sm:$0xff]
    %v71 = vld [vmem:[#allocation4 + $0x130] sm:$0xff]
    %v72 = vld [vmem:[#allocation4 + $0x138] sm:$0xff]
    %v73 = vld [vmem:[#allocation4 + $0x140] sm:$0xff]
    %v74 = vld [vmem:[#allocation4 + $0x148] sm:$0xff]
    %v75 = vld [vmem:[#allocation4 + $0x150] sm:$0xff]
    %v76 = vld [vmem:[#allocation4 + $0x158] sm:$0xff]
    %v77 = vld [vmem:[#allocation4 + $0x160] sm:$0xff]
    %v78 = vld [vmem:[#allocation4 + $0x168] sm:$0xff]
    %v79 = vld [vmem:[#allocation4 + $0x170] sm:$0xff]
    %v80 = vld [vmem:[#allocation4 + $0x178] sm:$0xff]
    %v81 = vld [vmem:[#allocation4 + $0x180] sm:$0xff]
    %v82 = vld [vmem:[#allocation4 + $0x188] sm:$0xff]
    %v83 = vld [vmem:[#allocation4 + $0x190] sm:$0xff]
    %v84 = vld [vmem:[#allocation4 + $0x198] sm:$0xff]
    %v85 = vld [vmem:[#allocation4 + $0x1a0] sm:$0xff]
    %v86 = vld [vmem:[#allocation4 + $0x1a8] sm:$0xff]
    %v87 = vld [vmem:[#allocation4 + $0x1b0] sm:$0xff]
    %v88 = vld [vmem:[#allocation4 + $0x1b8] sm:$0xff]
    %v89 = vld [vmem:[#allocation4 + $0x1c0] sm:$0xff]
    %v90 = vld [vmem:[#allocation4 + $0x1c8] sm:$0xff]
    %v91 = vld [vmem:[#allocation4 + $0x1d0] sm:$0xff]
    %v92 = vld [vmem:[#allocation4 + $0x1d8] sm:$0xff]
    %v93 = vld [vmem:[#allocation4 + $0x1e0] sm:$0xff]
    %v94 = vld [vmem:[#allocation4 + $0x1e8] sm:$0xff]
    %v95 = vld [vmem:[#allocation4 + $0x1f0] sm:$0xff]
    %v96 = vld [vmem:[#allocation4 + $0x1f8] sm:$0xff]
    %v97 = vstv %s31
    %v98 = vmul.f32 %v33, %v97
    %v99 = vmul.f32 %v34, %v97
    %v100 = vmul.f32 %v35, %v97
    %v101 = vmul.f32 %v36, %v97
    %v102 = vmul.f32 %v37, %v97
    %v103 = vmul.f32 %v38, %v97
    %v104 = vmul.f32 %v39, %v97
    %v105 = vmul.f32 %v40, %v97
    %v106 = vmul.f32 %v41, %v97
    %v107 = vmul.f32 %v42, %v97
    %v108 = vmul.f32 %v43, %v97
    %v109 = vmul.f32 %v44, %v97
    %v110 = vmul.f32 %v45, %v97
    %v111 = vmul.f32 %v46, %v97
    %v112 = vmul.f32 %v47, %v97
    %v113 = vmul.f32 %v48, %v97
    %v114 = vmul.f32 %v49, %v97
    %v115 = vmul.f32 %v50, %v97
    %v116 = vmul.f32 %v51, %v97
    %v117 = vmul.f32 %v52, %v97
    %v118 = vmul.f32 %v53, %v97
    %v119 = vmul.f32 %v54, %v97
    %v120 = vmul.f32 %v55, %v97
    %v121 = vmul.f32 %v56, %v97
    %v122 = vmul.f32 %v57, %v97
    %v123 = vmul.f32 %v58, %v97
    %v124 = vmul.f32 %v59, %v97
    %v125 = vmul.f32 %v60, %v97
    %v126 = vmul.f32 %v61, %v97
    %v127 = vmul.f32 %v62, %v97
    %v128 = vmul.f32 %v63, %v97
    %v129 = vmul.f32 %v64, %v97
    %v130 = vmul.f32 %v65, %v97
    %v131 = vmul.f32 %v66, %v97
    %v132 = vmul.f32 %v67, %v97
    %v133 = vmul.f32 %v68, %v97
    %v134 = vmul.f32 %v69, %v97
    %v135 = vmul.f32 %v70, %v97
    %v136 = vmul.f32 %v71, %v97
    %v137 = vmul.f32 %v72, %v97
    %v138 = vmul.f32 %v73, %v97
    %v139 = vmul.f32 %v74, %v97
    %v140 = vmul.f32 %v75, %v97
    %v141 = vmul.f32 %v76, %v97
    %v142 = vmul.f32 %v77, %v97
    %v143 = vmul.f32 %v78, %v97
    %v144 = vmul.f32 %v79, %v97
    %v145 = vmul.f32 %v80, %v97
    %v146 = vmul.f32 %v81, %v97
    %v147 = vmul.f32 %v82, %v97
    %v148 = vmul.f32 %v83, %v97
    %v149 = vmul.f32 %v84, %v97
    %v150 = vmul.f32 %v85, %v97
    %v151 = vmul.f32 %v86, %v97
    %v152 = vmul.f32 %v87, %v97
    %v153 = vmul.f32 %v88, %v97
    %v154 = vmul.f32 %v89, %v97
    %v155 = vmul.f32 %v90, %v97
    %v156 = vmul.f32 %v91, %v97
    %v157 = vmul.f32 %v92, %v97
    %v158 = vmul.f32 %v93, %v97
    %v159 = vmul.f32 %v94, %v97
    %v160 = vmul.f32 %v95, %v97
    %v161 = vmul.f32 %v96, %v97
    %v162 = vstv %s32
    %v163 = vadd.f32 %v98, %v162
    %v164 = vadd.f32 %v99, %v162
    %v165 = vadd.f32 %v100, %v162
    %v166 = vadd.f32 %v101, %v162
    %v167 = vadd.f32 %v102, %v162
    %v168 = vadd.f32 %v103, %v162
    %v169 = vadd.f32 %v104, %v162
    %v170 = vadd.f32 %v105, %v162
    %v171 = vadd.f32 %v106, %v162
    %v172 = vadd.f32 %v107, %v162
    %v173 = vadd.f32 %v108, %v162
    %v174 = vadd.f32 %v109, %v162
    %v175 = vadd.f32 %v110, %v162
    %v176 = vadd.f32 %v111, %v162
    %v177 = vadd.f32 %v112, %v162
    %v178 = vadd.f32 %v113, %v162
    %v179 = vadd.f32 %v114, %v162
    %v180 = vadd.f32 %v115, %v162
    %v181 = vadd.f32 %v116, %v162
    %v182 = vadd.f32 %v117, %v162
    %v183 = vadd.f32 %v118, %v162
    %v184 = vadd.f32 %v119, %v162
    %v185 = vadd.f32 %v120, %v162
    %v186 = vadd.f32 %v121, %v162
    %v187 = vadd.f32 %v122, %v162
    %v188 = vadd.f32 %v123, %v162
    %v189 = vadd.f32 %v124, %v162
    %v190 = vadd.f32 %v125, %v162
    %v191 = vadd.f32 %v126, %v162
    %v192 = vadd.f32 %v127, %v162
    %v193 = vadd.f32 %v128, %v162
    %v194 = vadd.f32 %v129, %v162
    %v195 = vadd.f32 %v130, %v162
    %v196 = vadd.f32 %v131, %v162
    %v197 = vadd.f32 %v132, %v162
    %v198 = vadd.f32 %v133, %v162
    %v199 = vadd.f32 %v134, %v162
    %v200 = vadd.f32 %v135, %v162
    %v201 = vadd.f32 %v136, %v162
    %v202 = vadd.f32 %v137, %v162
    %v203 = vadd.f32 %v138, %v162
    %v204 = vadd.f32 %v139, %v162
    %v205 = vadd.f32 %v140, %v162
    %v206 = vadd.f32 %v141, %v162
    %v207 = vadd.f32 %v142, %v162
    %v208 = vadd.f32 %v143, %v162
    %v209 = vadd.f32 %v144, %v162
    %v210 = vadd.f32 %v145, %v162
    %v211 = vadd.f32 %v146, %v162
    %v212 = vadd.f32 %v147, %v162
    %v213 = vadd.f32 %v148, %v162
    %v214 = vadd.f32 %v149, %v162
    %v215 = vadd.f32 %v150, %v162
    %v216 = vadd.f32 %v151, %v162
    %v217 = vadd.f32 %v152, %v162
    %v218 = vadd.f32 %v153, %v162
    %v219 = vadd.f32 %v154, %v162
    %v220 = vadd.f32 %v155, %v162
    %v221 = vadd.f32 %v156, %v162
    %v222 = vadd.f32 %v157, %v162
    %v223 = vadd.f32 %v158, %v162
    %v224 = vadd.f32 %v159, %v162
    %v225 = vadd.f32 %v160, %v162
    %v226 = vadd.f32 %v161, %v162
    %v227 = vtanh.pop %v163
    %v228 = vtanh.pop %v164
    %v229 = vtanh.pop %v165
    %v230 = vtanh.pop %v166
    %v231 = vtanh.pop %v167
    %v232 = vtanh.pop %v168
    %v233 = vtanh.pop %v169
    %v234 = vtanh.pop %v170
    %v235 = vtanh.pop %v171
    %v236 = vtanh.pop %v172
    %v237 = vtanh.pop %v173
    %v238 = vtanh.pop %v174
    %v239 = vtanh.pop %v175
    %v240 = vtanh.pop %v176
    %v241 = vtanh.pop %v177
    %v242 = vtanh.pop %v178
    %v243 = vtanh.pop %v179
    %v244 = vtanh.pop %v180
    %v245 = vtanh.pop %v181
    %v246 = vtanh.pop %v182
    %v247 = vtanh.pop %v183
    %v248 = vtanh.pop %v184
    %v249 = vtanh.pop %v185
    %v250 = vtanh.pop %v186
    %v251 = vtanh.pop %v187
    %v252 = vtanh.pop %v188
    %v253 = vtanh.pop %v189
    %v254 = vtanh.pop %v190
    %v255 = vtanh.pop %v191
    %v256 = vtanh.pop %v192
    %v257 = vtanh.pop %v193
    %v258 = vtanh.pop %v194
    %v259 = vtanh.pop %v195
    %v260 = vtanh.pop %v196
    %v261 = vtanh.pop %v197
    %v262 = vtanh.pop %v198
    %v263 = vtanh.pop %v199
    %v264 = vtanh.pop %v200
    %v265 = vtanh.pop %v201
    %v266 = vtanh.pop %v202
    %v267 = vtanh.pop %v203
    %v268 = vtanh.pop %v204
    %v269 = vtanh.pop %v205
    %v270 = vtanh.pop %v206
    %v271 = vtanh.pop %v207
    %v272 = vtanh.pop %v208
    %v273 = vtanh.pop %v209
    %v274 = vtanh.pop %v210
    %v275 = vtanh.pop %v211
    %v276 = vtanh.pop %v212
    %v277 = vtanh.pop %v213
    %v278 = vtanh.pop %v214
    %v279 = vtanh.pop %v215
    %v280 = vtanh.pop %v216
    %v281 = vtanh.pop %v217
    %v282 = vtanh.pop %v218
    %v283 = vtanh.pop %v219
    %v284 = vtanh.pop %v220
    %v285 = vtanh.pop %v221
    %v286 = vtanh.pop %v222
    %v287 = vtanh.pop %v223
    %v288 = vtanh.pop %v224
    %v289 = vtanh.pop %v225
    %v290 = vtanh.pop %v226
    %291 = vst [vmem:[#allocation7] sm:$0xff] %v227
    %292 = vst [vmem:[#allocation7 + $0x8] sm:$0xff] %v228
    %293 = vst [vmem:[#allocation7 + $0x10] sm:$0xff] %v229
    %294 = vst [vmem:[#allocation7 + $0x18] sm:$0xff] %v230
    %295 = vst [vmem:[#allocation7 + $0x20] sm:$0xff] %v231
    %296 = vst [vmem:[#allocation7 + $0x28] sm:$0xff] %v232
    %297 = vst [vmem:[#allocation7 + $0x30] sm:$0xff] %v233
    %298 = vst [vmem:[#allocation7 + $0x38] sm:$0xff] %v234
    %299 = vst [vmem:[#allocation7 + $0x40] sm:$0xff] %v235
    %300 = vst [vmem:[#allocation7 + $0x48] sm:$0xff] %v236
    %301 = vst [vmem:[#allocation7 + $0x50] sm:$0xff] %v237
    %302 = vst [vmem:[#allocation7 + $0x58] sm:$0xff] %v238
    %303 = vst [vmem:[#allocation7 + $0x60] sm:$0xff] %v239
    %304 = vst [vmem:[#allocation7 + $0x68] sm:$0xff] %v240
    %305 = vst [vmem:[#allocation7 + $0x70] sm:$0xff] %v241
    %306 = vst [vmem:[#allocation7 + $0x78] sm:$0xff] %v242
    %307 = vst [vmem:[#allocation7 + $0x80] sm:$0xff] %v243
    %308 = vst [vmem:[#allocation7 + $0x88] sm:$0xff] %v244
    %309 = vst [vmem:[#allocation7 + $0x90] sm:$0xff] %v245
    %310 = vst [vmem:[#allocation7 + $0x98] sm:$0xff] %v246
    %311 = vst [vmem:[#allocation7 + $0xa0] sm:$0xff] %v247
    %312 = vst [vmem:[#allocation7 + $0xa8] sm:$0xff] %v248
    %313 = vst [vmem:[#allocation7 + $0xb0] sm:$0xff] %v249
    %314 = vst [vmem:[#allocation7 + $0xb8] sm:$0xff] %v250
    %315 = vst [vmem:[#allocation7 + $0xc0] sm:$0xff] %v251
    %316 = vst [vmem:[#allocation7 + $0xc8] sm:$0xff] %v252
    %317 = vst [vmem:[#allocation7 + $0xd0] sm:$0xff] %v253
    %318 = vst [vmem:[#allocation7 + $0xd8] sm:$0xff] %v254
    %319 = vst [vmem:[#allocation7 + $0xe0] sm:$0xff] %v255
    %320 = vst [vmem:[#allocation7 + $0xe8] sm:$0xff] %v256
    %321 = vst [vmem:[#allocation7 + $0xf0] sm:$0xff] %v257
    %322 = vst [vmem:[#allocation7 + $0xf8] sm:$0xff] %v258
    %323 = vst [vmem:[#allocation7 + $0x100] sm:$0xff] %v259
    %324 = vst [vmem:[#allocation7 + $0x108] sm:$0xff] %v260
    %325 = vst [vmem:[#allocation7 + $0x110] sm:$0xff] %v261
    %326 = vst [vmem:[#allocation7 + $0x118] sm:$0xff] %v262
    %327 = vst [vmem:[#allocation7 + $0x120] sm:$0xff] %v263
    %328 = vst [vmem:[#allocation7 + $0x128] sm:$0xff] %v264
    %329 = vst [vmem:[#allocation7 + $0x130] sm:$0xff] %v265
    %330 = vst [vmem:[#allocation7 + $0x138] sm:$0xff] %v266
    %331 = vst [vmem:[#allocation7 + $0x140] sm:$0xff] %v267
    %332 = vst [vmem:[#allocation7 + $0x148] sm:$0xff] %v268
    %333 = vst [vmem:[#allocation7 + $0x150] sm:$0xff] %v269
    %334 = vst [vmem:[#allocation7 + $0x158] sm:$0xff] %v270
    %335 = vst [vmem:[#allocation7 + $0x160] sm:$0xff] %v271
    %336 = vst [vmem:[#allocation7 + $0x168] sm:$0xff] %v272
    %337 = vst [vmem:[#allocation7 + $0x170] sm:$0xff] %v273
    %338 = vst [vmem:[#allocation7 + $0x178] sm:$0xff] %v274
    %339 = vst [vmem:[#allocation7 + $0x180] sm:$0xff] %v275
    %340 = vst [vmem:[#allocation7 + $0x188] sm:$0xff] %v276
    %341 = vst [vmem:[#allocation7 + $0x190] sm:$0xff] %v277
    %342 = vst [vmem:[#allocation7 + $0x198] sm:$0xff] %v278
    %343 = vst [vmem:[#allocation7 + $0x1a0] sm:$0xff] %v279
    %344 = vst [vmem:[#allocation7 + $0x1a8] sm:$0xff] %v280
    %345 = vst [vmem:[#allocation7 + $0x1b0] sm:$0xff] %v281
    %346 = vst [vmem:[#allocation7 + $0x1b8] sm:$0xff] %v282
    %347 = vst [vmem:[#allocation7 + $0x1c0] sm:$0xff] %v283
    %348 = vst [vmem:[#allocation7 + $0x1c8] sm:$0xff] %v284
    %349 = vst [vmem:[#allocation7 + $0x1d0] sm:$0xff] %v285
    %350 = vst [vmem:[#allocation7 + $0x1d8] sm:$0xff] %v286
    %351 = vst [vmem:[#allocation7 + $0x1e0] sm:$0xff] %v287
    %352 = vst [vmem:[#allocation7 + $0x1e8] sm:$0xff] %v288
    %353 = vst [vmem:[#allocation7 + $0x1f0] sm:$0xff] %v289
    %354 = vst [vmem:[#allocation7 + $0x1f8] sm:$0xff] %v290
    // Predicated region
    $region18: #{tpu_custom_call.1} parent=1 // pred_check
      _
    $region19: #{tpu_custom_call.1} parent=1 // pred_check_branch
      %356 = sbr.rel (0) target = $region21
    $region20: #{tpu_custom_call.1} parent=1 // pred_region
      %s358 = ssub.s32 8192, 8192
      %359 = vsyncadd [#allocation6], %s358
      %s360 = sshll.u32 [#allocation7], 4
      %s361 = int_to_ptr.vmem [resolvable:$true] %s360
      %366 = dma.vmem_to_hbm [thread:$0]  %s361, 8192, %s3, [#allocation6], 1024, 1024, 64
    $region21: #{tpu_custom_call.1} parent=1 // pred_fallthru
      _
    // Predicated region
    $region22: #{tpu_custom_call.1} parent=1 // pred_check
      _
    $region23: #{tpu_custom_call.1} parent=1 // pred_check_branch
      %368 = sbr.rel (0) target = $region25
    $region24: #{tpu_custom_call.1} parent=1 // pred_region
      %369 = dma.done [#allocation6], 8192
    $region25: #{tpu_custom_call.1} parent=1 // pred_fallthru
      _
    %370 = vsyncpa [#allocation5], 1
    %371 = vsyncpa [#allocation6], 1

</llo_original>
